<compile_context>
chip_gen: v5e
topology: v5e:2x2
jax: 0.10.0
libtpu: 0.0.40
codegen_flags: <defaults>
</compile_context>

<pallas_src>
import functools

import jax
import jax.numpy as jnp
from jax.experimental import pallas as pl
from jax.experimental.pallas import tpu as pltpu


def _round_up(v, m):
    return ((v + m - 1) // m) * m


def _cdiv(a, b):
    return -(-a // b)


def _vmem_capacity_bytes():
    """Physical VMEM bytes for the local chip (conservative fallback)."""
    try:
        cap = getattr(pltpu.get_tpu_info(), "vmem_capacity_bytes", None)
        if cap:
            return max(int(cap), 48 << 20)
    except Exception:
        pass
    return 64 << 20  # v7x-sized default (smallest current generation)


def _split3_bf16(a):
    """Split an f32 array into 3 bf16 components whose sum matches a to ~2^-24."""
    hi = a.astype(jnp.bfloat16)
    r1 = a - hi.astype(jnp.float32)
    mid = r1.astype(jnp.bfloat16)
    lo = (r1 - mid.astype(jnp.float32)).astype(jnp.bfloat16)
    return hi, mid, lo


def _split_dot(a_f32, p_bf16):
    """a @ p with ~f32 LHS precision using 3 single-pass bf16 MXU matmuls."""
    hi, mid, lo = _split3_bf16(a_f32)
    out = jnp.dot(hi, p_bf16, preferred_element_type=jnp.float32)
    out = out + jnp.dot(mid, p_bf16, preferred_element_type=jnp.float32)
    out = out + jnp.dot(lo, p_bf16, preferred_element_type=jnp.float32)
    return out


def _var_pool_kernel(x_ref, p_ref, o_ref, *, kernel_size):
    # x_ref: (TM, T) input rows; p_ref: (T, TNp) 0/1 bf16; o_ref: (TM, TNo)
    x = x_ref[...].astype(jnp.float32)
    # Center each row (variance is translation invariant): removes the
    # catastrophic-cancellation risk of the E[x^2]-E[x]^2 form for signals
    # with a large DC offset.
    x = x - jnp.mean(x, axis=-1, keepdims=True)
    p = p_ref[...]

    s1 = _split_dot(x, p)        # per-window sum
    s2 = _split_dot(x * x, p)    # per-window sum of squares

    inv_k = 1.0 / kernel_size
    # torch.var default is unbiased (ddof=1); kernel_size == 1 yields NaN in
    # torch as well — mirror that rather than divide by zero at trace time.
    inv_km1 = 1.0 / (kernel_size - 1) if kernel_size > 1 else float("nan")
    var = (s2 - s1 * s1 * inv_k) * inv_km1

    # Drop the matmul lane padding before log/clip so no EUP work is wasted
    # on padded columns (o_ref's last dim is the true per-block output width).
    var = var[:, : o_ref.shape[-1]]
    o_ref[...] = jnp.log(jnp.clip(var, 1e-6, 1e6)).astype(o_ref.dtype)


def enhanced_variance_pooling(x, kernel_size, stride):
    """x: (N, C, T) -> (N, C, (T - kernel_size)//stride + 1)."""
    N, C, T = x.shape
    out_len = (T - kernel_size) // stride + 1
    assert out_len >= 1, "kernel_size larger than the time dimension"
    R = N * C
    x2 = x.reshape(R, T)                       # contiguous reshape: no copy

    # ---- generation-aware VMEM budget --------------------------------------
    cap = _vmem_capacity_bytes()
    budget = max(24 << 20, min(cap - (16 << 20), 96 << 20))

    # ---- output-column blocking (caps P's VMEM for very long out_len) ------
    olp = _round_up(out_len, 128)              # lane-aligned matmul width
    p_budget = budget // 3
    tn_max = max(128, ((p_budget // (4 * T)) // 128) * 128)  # P dbuf = 4*T*tn B
    if olp <= tn_max:
        tn_p, n_col = olp, 1                   # single column block
        tn_o = out_len                         # out block = full (true) out dim
    else:
        tn_p = tn_max
        n_col = _cdiv(out_len, tn_p)
        tn_o = tn_p                            # ragged last block handled by Pallas
    p_cols = n_col * tn_p                      # P padded with all-zero columns
    p_block_bytes = 2 * (T * tn_p * 2)         # bf16, double-buffered

    # ---- row tiling ---------------------------------------------------------
    # Per-row VMEM: 2x f32 x block (double buffer) + centered x + x*x (f32)
    # + 6 bf16 split slabs, plus out block / s1 / s2 / var on the tn_p side.
    per_row = 4 * (8 * T + 6 * tn_p)
    tm_fit = max(8, (budget - p_block_bytes) // per_row)
    # Keep >= ~4 row tiles: shards the parallel axis across v7x's 2 TensorCores
    # and gives the pipeline something to overlap on every generation.
    tm_split = max(8, _round_up(_cdiv(R, 4), 8))
    if R < 8:
        tm = R                                 # block == full dim is allowed
    else:
        tm = min(tm_fit, tm_split, 2048)
        tm = max(8, (tm // 8) * 8)
    n_row = _cdiv(R, tm)

    # ---- constant 0/1 pooling matrix P: (T, p_cols), exact in bf16 ----------
    t_idx = jnp.arange(T)[:, None]
    j_idx = jnp.arange(p_cols)[None, :]
    w_start = j_idx * stride
    pmat = ((j_idx < out_len) & (t_idx >= w_start)
            & (t_idx < w_start + kernel_size)).astype(jnp.bfloat16)

    # ---- VMEM limit: block buffers + in-kernel temporaries + slack ----------
    vmem_needed = p_block_bytes + per_row * tm + (4 << 20)
    vmem_limit = int(min(max(vmem_needed, 32 << 20), cap - (8 << 20)))

    cost = pl.CostEstimate(
        flops=int(2 * 6 * R * T * p_cols),             # 6 bf16 MXU passes total
        transcendentals=int(R * out_len),              # log()
        bytes_accessed=int(4 * R * T + 4 * R * out_len + 2 * T * p_cols * n_row),
    )

    kernel = functools.partial(_var_pool_kernel, kernel_size=kernel_size)
    out = pl.pallas_call(
        kernel,
        out_shape=jax.ShapeDtypeStruct((R, out_len), x.dtype),
        grid=(n_row, n_col),
        in_specs=[
            pl.BlockSpec((tm, T), lambda i, j: (i, 0)),    # row slab, j-invariant
            pl.BlockSpec((T, tn_p), lambda i, j: (0, j)),  # P column block (bf16)
        ],
        out_specs=pl.BlockSpec((tm, tn_o), lambda i, j: (i, j)),
        compiler_params=pltpu.CompilerParams(
            dimension_semantics=("parallel", "parallel"),
            vmem_limit_bytes=vmem_limit,
        ),
        cost_estimate=cost,
    )(x2, pmat)

    return out.reshape(N, C, out_len)


def _reference(x, kernel_size, stride):
    # pure-JAX reference mirroring the PyTorch forward
    N, C, T = x.shape
    out_len = (T - kernel_size) // stride + 1
    outs = []
    for i in range(out_len):
        w = x[:, :, i * stride:i * stride + kernel_size]
        var = jnp.var(w, axis=-1, ddof=1, keepdims=True)
        outs.append(jnp.log(jnp.clip(var, 1e-6, 1e6)))
    return jnp.concatenate(outs, axis=-1)


if __name__ == "__main__":
    key = jax.random.PRNGKey(0)
    N, C, T = 2, 4, 16
    kernel_size, stride = 4, 2
    x = jax.random.normal(key, (N, C, T), dtype=jnp.float32)

    out = enhanced_variance_pooling(x, kernel_size, stride)
    out = jax.block_until_ready(out)

    ref = _reference(x, kernel_size, stride)
    assert out.shape == ref.shape, (out.shape, ref.shape)
    # log(var) comparison; 3-way bf16 split gives ~f32-equivalent matmul
    # precision, small margin for the one-pass vs two-pass variance formula.
    assert jnp.allclose(out, ref, atol=2e-4, rtol=2e-4), "mismatch vs reference"

    print("KERNEL_OK")
</pallas_src>

<mosaic_0001>
module attributes {stable_mosaic.version = 11 : i64} {
  func.func @_var_pool_kernel(%arg0: i32, %arg1: i32, %arg2: memref<8x16xf32, #tpu.memory_space<vmem>>, %arg3: memref<16x128xbf16, #tpu.memory_space<vmem>>, %arg4: memref<8x7xf32, #tpu.memory_space<vmem>>) attributes {dimension_semantics = [#tpu.dimension_semantics<parallel>, #tpu.dimension_semantics<parallel>], iteration_bounds = array<i64: 1, 1>, scalar_prefetch = 0 : i64, scratch_operands = 0 : i64, tpu.core_type = #tpu.core_type<tc>, window_params = [{transform_indices = @transform_0, window_bounds = array<i64: 8, 16>}, {transform_indices = @transform_1, window_bounds = array<i64: 16, 128>}, {transform_indices = @transform_2, window_bounds = array<i64: 8, 7>}]} {
    %c0 = arith.constant 0 : index
    %c0_0 = arith.constant 0 : index
    %0 = vector.load %arg2[%c0, %c0_0] : memref<8x16xf32, #tpu.memory_space<vmem>>, vector<8x16xf32>
    %cst = arith.constant dense<0.000000e+00> : vector<8xf32>
    %1 = vector.multi_reduction <add>, %0, %cst [1] : vector<8x16xf32> to vector<8xf32>
    %2 = vector.shape_cast %1 : vector<8xf32> to vector<8x1xf32>
    %cst_1 = arith.constant 1.600000e+01 : f32
    %3 = vector.broadcast %cst_1 : f32 to vector<8x1xf32>
    %4 = arith.divf %2, %3 : vector<8x1xf32>
    %5 = vector.broadcast %4 : vector<8x1xf32> to vector<8x16xf32>
    %6 = arith.subf %0, %5 : vector<8x16xf32>
    %c0_2 = arith.constant 0 : index
    %c0_3 = arith.constant 0 : index
    %7 = vector.load %arg3[%c0_2, %c0_3] : memref<16x128xbf16, #tpu.memory_space<vmem>>, vector<16x128xbf16>
    %8 = arith.truncf %6 : vector<8x16xf32> to vector<8x16xbf16>
    %9 = arith.extf %8 : vector<8x16xbf16> to vector<8x16xf32>
    %10 = arith.subf %6, %9 : vector<8x16xf32>
    %11 = arith.truncf %10 : vector<8x16xf32> to vector<8x16xbf16>
    %12 = arith.extf %11 : vector<8x16xbf16> to vector<8x16xf32>
    %13 = arith.subf %10, %12 : vector<8x16xf32>
    %14 = arith.truncf %13 : vector<8x16xf32> to vector<8x16xbf16>
    %cst_4 = arith.constant dense<0.000000e+00> : vector<8x128xf32>
    %15 = tpu.matmul %8, %7, %cst_4 {dimension_numbers = #tpu.dot_dimension_numbers<[1], [0], [0], [1], [0, 0, 1, 1], [], []>} : vector<8x16xbf16>, vector<16x128xbf16>, vector<8x128xf32> -> vector<8x128xf32>
    %cst_5 = arith.constant dense<0.000000e+00> : vector<8x128xf32>
    %16 = tpu.matmul %11, %7, %cst_5 {dimension_numbers = #tpu.dot_dimension_numbers<[1], [0], [0], [1], [0, 0, 1, 1], [], []>} : vector<8x16xbf16>, vector<16x128xbf16>, vector<8x128xf32> -> vector<8x128xf32>
    %17 = arith.addf %15, %16 : vector<8x128xf32>
    %cst_6 = arith.constant dense<0.000000e+00> : vector<8x128xf32>
    %18 = tpu.matmul %14, %7, %cst_6 {dimension_numbers = #tpu.dot_dimension_numbers<[1], [0], [0], [1], [0, 0, 1, 1], [], []>} : vector<8x16xbf16>, vector<16x128xbf16>, vector<8x128xf32> -> vector<8x128xf32>
    %19 = arith.addf %17, %18 : vector<8x128xf32>
    %20 = arith.mulf %6, %6 : vector<8x16xf32>
    %21 = arith.truncf %20 : vector<8x16xf32> to vector<8x16xbf16>
    %22 = arith.extf %21 : vector<8x16xbf16> to vector<8x16xf32>
    %23 = arith.subf %20, %22 : vector<8x16xf32>
    %24 = arith.truncf %23 : vector<8x16xf32> to vector<8x16xbf16>
    %25 = arith.extf %24 : vector<8x16xbf16> to vector<8x16xf32>
    %26 = arith.subf %23, %25 : vector<8x16xf32>
    %27 = arith.truncf %26 : vector<8x16xf32> to vector<8x16xbf16>
    %cst_7 = arith.constant dense<0.000000e+00> : vector<8x128xf32>
    %28 = tpu.matmul %21, %7, %cst_7 {dimension_numbers = #tpu.dot_dimension_numbers<[1], [0], [0], [1], [0, 0, 1, 1], [], []>} : vector<8x16xbf16>, vector<16x128xbf16>, vector<8x128xf32> -> vector<8x128xf32>
    %cst_8 = arith.constant dense<0.000000e+00> : vector<8x128xf32>
    %29 = tpu.matmul %24, %7, %cst_8 {dimension_numbers = #tpu.dot_dimension_numbers<[1], [0], [0], [1], [0, 0, 1, 1], [], []>} : vector<8x16xbf16>, vector<16x128xbf16>, vector<8x128xf32> -> vector<8x128xf32>
    %30 = arith.addf %28, %29 : vector<8x128xf32>
    %cst_9 = arith.constant dense<0.000000e+00> : vector<8x128xf32>
    %31 = tpu.matmul %27, %7, %cst_9 {dimension_numbers = #tpu.dot_dimension_numbers<[1], [0], [0], [1], [0, 0, 1, 1], [], []>} : vector<8x16xbf16>, vector<16x128xbf16>, vector<8x128xf32> -> vector<8x128xf32>
    %32 = arith.addf %30, %31 : vector<8x128xf32>
    %33 = arith.mulf %19, %19 : vector<8x128xf32>
    %cst_10 = arith.constant 2.500000e-01 : f32
    %34 = vector.broadcast %cst_10 : f32 to vector<8x128xf32>
    %35 = arith.mulf %33, %34 : vector<8x128xf32>
    %36 = arith.subf %32, %35 : vector<8x128xf32>
    %cst_11 = arith.constant 0.333333343 : f32
    %37 = vector.broadcast %cst_11 : f32 to vector<8x128xf32>
    %38 = arith.mulf %36, %37 : vector<8x128xf32>
    %39 = vector.extract_strided_slice %38 {offsets = [0, 0], sizes = [8, 7], strides = [1, 1]} : vector<8x128xf32> to vector<8x7xf32>
    %cst_12 = arith.constant 9.99999997E-7 : f32
    %cst_13 = arith.constant 1.000000e+06 : f32
    %40 = vector.broadcast %cst_12 : f32 to vector<8x7xf32>
    %41 = arith.maximumf %40, %39 : vector<8x7xf32>
    %42 = vector.broadcast %cst_13 : f32 to vector<8x7xf32>
    %43 = arith.minimumf %42, %41 : vector<8x7xf32>
    %44 = math.log %43 : vector<8x7xf32>
    %c0_14 = arith.constant 0 : index
    %c0_15 = arith.constant 0 : index
    %45 = vector.load %arg4[%c0_14, %c0_15] : memref<8x7xf32, #tpu.memory_space<vmem>>, vector<8x7xf32>
    tpu.vector_store %arg4[%c0_14, %c0_15], %44 {strides = array<i32>} : memref<8x7xf32, #tpu.memory_space<vmem>>, vector<8x7xf32>,
    return
  }
  func.func @transform_0(%arg0: i32, %arg1: i32) -> (i32, i32) {
    %c0_i32 = arith.constant 0 : i32
    %c0_i32_0 = arith.constant 0 : i32
    return %arg0, %c0_i32 : i32, i32
  }
  func.func @transform_1(%arg0: i32, %arg1: i32) -> (i32, i32) {
    %c0_i32 = arith.constant 0 : i32
    %c0_i32_0 = arith.constant 0 : i32
    return %c0_i32, %arg1 : i32, i32
  }
  func.func @transform_2(%arg0: i32, %arg1: i32) -> (i32, i32) {
    %c0_i32 = arith.constant 0 : i32
    return %arg0, %arg1 : i32, i32
  }
}

</mosaic_0001>

<llo_original>
// kernel: tpu_custom_call.1
$region0: #{tpu_custom_call.1}
  #allocation0 [shape = 'u32[]', space=smem, size = 0x4, offset = 0x4, fixed_abs, tag = 'smem constant byte address 0x4 - core index']
  #allocation1 [shape = 'u32[72,128]{1,0:T(1,128)}', space=vmem, size = 0x9000, scoped, tag = 'internal scratch']
  %s0 = inlined_call_operand.hbm [shape: f32[8,16], index: 0, kind: input, shape index: {}]
  %s1 = inlined_call_operand.hbm [shape: bf16[16,128], index: 1, kind: input, shape index: {}]
  %s2 = inlined_call_operand.hbm [shape: f32[8,7], index: 2, kind: output, shape index: {}]
  %s3 = sld [smem:[#allocation0]]
  $region26: #{tpu_custom_call.1} parent=0
    _
  %s5 = ssub.s32 1, %s3
  %s6 = scalar_select 0, %s5, %s3
  $region1: #{tpu_custom_call.1} parent=0
    #allocation2 [shape = 'u8[4096]{0}', space=vmem, size = 0x1000, scoped, tag = 'input window, operand 0, single buffered']
    #allocation3 [shape = 's32[1]{0}', space=sflag, size = 0x4, scoped, tag = 'scoped memory for tpu_custom_call.1']
    #allocation4 [shape = 's32[1]{0}', space=sflag, size = 0x4, scoped, tag = 'scoped memory for tpu_custom_call.1']
    #allocation5 [shape = 'u8[4096]{0}', space=vmem, size = 0x1000, scoped, tag = 'input window, operand 1, single buffered']
    #allocation6 [shape = 's32[1]{0}', space=sflag, size = 0x4, scoped, tag = 'scoped memory for tpu_custom_call.1']
    #allocation7 [shape = 'u8[4096]{0}', space=vmem, size = 0x1000, scoped, tag = 'output window, operand 0, single buffered']
    %7 = vsyncpa [#allocation3], 0
    %8 = vsyncpa [#allocation6], 0
    %9 = vsyncpa [#allocation4], 0
    // Predicated region
    $region2: #{tpu_custom_call.1} parent=1 // pred_check
      _
    $region3: #{tpu_custom_call.1} parent=1 // pred_check_branch
      %11 = sbr.rel (0) target = $region5
    $region4: #{tpu_custom_call.1} parent=1 // pred_region
      %13 = vsyncadd [#allocation3], 0
      %s15 = sshll.u32 %s0, 4
      %s16 = int_to_ptr.hbm [resolvable:$true] %s15
      %s17 = sshll.u32 [#allocation2], 4
      %s18 = int_to_ptr.vmem [resolvable:$true] %s17
      %20 = dma.hbm_to_vmem [thread:$0]  %s16, 128, %s18, [#allocation3]
    $region5: #{tpu_custom_call.1} parent=1 // pred_fallthru
      _
    // Predicated region
    $region6: #{tpu_custom_call.1} parent=1 // pred_check
      _
    $region7: #{tpu_custom_call.1} parent=1 // pred_check_branch
      %22 = sbr.rel (0) target = $region9
    $region8: #{tpu_custom_call.1} parent=1 // pred_region
      %24 = vsyncadd [#allocation6], 0
      %s25 = sshll.u32 %s1, 4
      %s26 = int_to_ptr.hbm [resolvable:$true] %s25
      %s27 = sshll.u32 [#allocation5], 4
      %s28 = int_to_ptr.vmem [resolvable:$true] %s27
      %33 = dma.hbm_to_vmem [thread:$0]  %s26, 128, %s28, [#allocation6], 64, 64, 4
    $region9: #{tpu_custom_call.1} parent=1 // pred_fallthru
      _
    // Predicated region
    $region10: #{tpu_custom_call.1} parent=1 // pred_check
      _
    $region11: #{tpu_custom_call.1} parent=1 // pred_check_branch
      %35 = sbr.rel (0) target = $region13
    $region12: #{tpu_custom_call.1} parent=1 // pred_region
      %37 = dma.done [#allocation3], 128
    $region13: #{tpu_custom_call.1} parent=1 // pred_fallthru
      _
    // Predicated region
    $region14: #{tpu_custom_call.1} parent=1 // pred_check
      _
    $region15: #{tpu_custom_call.1} parent=1 // pred_check_branch
      %39 = sbr.rel (0) target = $region17
    $region16: #{tpu_custom_call.1} parent=1 // pred_region
      %41 = dma.done [#allocation6], 128
    $region17: #{tpu_custom_call.1} parent=1 // pred_fallthru
      _
    %v43 = vld [vmem:[#allocation2] sm:$0xff]
    %vm44 = vcmask 130048
    %v45 = vsel %vm44, %v43, 0.0
    %46 = vadd.xlane.f32.xlu0 %v45
    %v47 = vpop.xlane.xlu0 %46
    %v48 = vrcp.pop 16.0
    %v49 = vmul.f32 16.0, %v48
    %v50 = vsub.f32 1.0, %v49
    %v51 = vmul.f32 %v48, %v50
    %v52 = vadd.f32 %v48, %v51
    %vm53 = vweird.f32 %v48
    %v54 = vsel %vm53, %v48, %v52
    %v55 = vmul.f32 %v47, %v54
    %v56 = vsub.f32 %v43, %v55
    %v57 = vld [vmem:[#allocation5] sm:$0xf]
    %v58 = vld [vmem:[#allocation5 + $0x4] sm:$0xf]
    %v59 = vpack.c.bf16 %v56, %v56
    %v60 = vunpack.c.l.bf16 %v59
    %v61 = vsub.f32 %v56, %v60
    %v62 = vpack.c.bf16 %v61, %v61
    %v63 = vunpack.c.l.bf16 %v62
    %v64 = vsub.f32 %v61, %v63
    %v65 = vpack.c.bf16 %v64, %v64
    %v68 = vunpack.c.l.b16 %v57
    %v69 = vunpack.c.l.b16 %v58
    %v70 = vpack.c.b16 %v69, %v68
    %v73 = vsel %vm44, %v62, 0
    %75 = vmatpush.bf16.msra.mxu0 0
    %76 = vmatpush.bf16.msra.mxu0 0
    %77 = vmatpush.bf16.msra.mxu0 0
    %78 = vmatpush.bf16.msra.mxu0 0
    %79 = vmatpush.bf16.msra.mxu0 0
    %80 = vmatpush.bf16.msra.mxu0 0
    %81 = vmatpush.bf16.msra.mxu0 0
    %82 = vmatpush.bf16.msra.mxu0 %v70
    %83 = vmatmul.bf16.gmra.mxu0 %v73
    %v84 = vpop.f32.mrf.mxu0
    %v85 = vadd.f32 0.0, %v84
    %v86 = vpop.f32.mrf.mxu0
    %87 = vdwg.mxu0
    %v89 = vsel %vm44, %v59, 0
    %91 = vmatpush.bf16.msra.mxu0 0
    %92 = vmatpush.bf16.msra.mxu0 0
    %93 = vmatpush.bf16.msra.mxu0 0
    %94 = vmatpush.bf16.msra.mxu0 0
    %95 = vmatpush.bf16.msra.mxu0 0
    %96 = vmatpush.bf16.msra.mxu0 0
    %97 = vmatpush.bf16.msra.mxu0 0
    %98 = vmatpush.bf16.msra.mxu0 %v70
    %99 = vmatmul.bf16.gmra.mxu0 %v89
    %v100 = vpop.f32.mrf.mxu0
    %v101 = vadd.f32 %v85, %v100
    %v102 = vpop.f32.mrf.mxu0
    %103 = vdwg.mxu0
    %v105 = vsel %vm44, %v65, 0
    %107 = vmatpush.bf16.msra.mxu0 0
    %108 = vmatpush.bf16.msra.mxu0 0
    %109 = vmatpush.bf16.msra.mxu0 0
    %110 = vmatpush.bf16.msra.mxu0 0
    %111 = vmatpush.bf16.msra.mxu0 0
    %112 = vmatpush.bf16.msra.mxu0 0
    %113 = vmatpush.bf16.msra.mxu0 0
    %114 = vmatpush.bf16.msra.mxu0 %v70
    %115 = vmatmul.bf16.gmra.mxu0 %v105
    %v116 = vpop.f32.mrf.mxu0
    %v117 = vadd.f32 0.0, %v116
    %v118 = vpop.f32.mrf.mxu0
    %119 = vdwg.mxu0
    %v120 = vadd.f32 %v101, %v117
    %v121 = vmul.f32 %v56, %v56
    %v122 = vpack.c.bf16 %v121, %v121
    %v123 = vunpack.c.l.bf16 %v122
    %v124 = vsub.f32 %v121, %v123
    %v125 = vpack.c.bf16 %v124, %v124
    %v126 = vunpack.c.l.bf16 %v125
    %v127 = vsub.f32 %v124, %v126
    %v128 = vpack.c.bf16 %v127, %v127
    %v130 = vsel %vm44, %v125, 0
    %132 = vmatpush.bf16.msra.mxu0 0
    %133 = vmatpush.bf16.msra.mxu0 0
    %134 = vmatpush.bf16.msra.mxu0 0
    %135 = vmatpush.bf16.msra.mxu0 0
    %136 = vmatpush.bf16.msra.mxu0 0
    %137 = vmatpush.bf16.msra.mxu0 0
    %138 = vmatpush.bf16.msra.mxu0 0
    %139 = vmatpush.bf16.msra.mxu0 %v70
    %140 = vmatmul.bf16.gmra.mxu0 %v130
    %v141 = vpop.f32.mrf.mxu0
    %v142 = vadd.f32 0.0, %v141
    %v143 = vpop.f32.mrf.mxu0
    %144 = vdwg.mxu0
    %v146 = vsel %vm44, %v122, 0
    %148 = vmatpush.bf16.msra.mxu0 0
    %149 = vmatpush.bf16.msra.mxu0 0
    %150 = vmatpush.bf16.msra.mxu0 0
    %151 = vmatpush.bf16.msra.mxu0 0
    %152 = vmatpush.bf16.msra.mxu0 0
    %153 = vmatpush.bf16.msra.mxu0 0
    %154 = vmatpush.bf16.msra.mxu0 0
    %155 = vmatpush.bf16.msra.mxu0 %v70
    %156 = vmatmul.bf16.gmra.mxu0 %v146
    %v157 = vpop.f32.mrf.mxu0
    %v158 = vadd.f32 %v142, %v157
    %v159 = vpop.f32.mrf.mxu0
    %160 = vdwg.mxu0
    %v162 = vsel %vm44, %v128, 0
    %164 = vmatpush.bf16.msra.mxu0 0
    %165 = vmatpush.bf16.msra.mxu0 0
    %166 = vmatpush.bf16.msra.mxu0 0
    %167 = vmatpush.bf16.msra.mxu0 0
    %168 = vmatpush.bf16.msra.mxu0 0
    %169 = vmatpush.bf16.msra.mxu0 0
    %170 = vmatpush.bf16.msra.mxu0 0
    %171 = vmatpush.bf16.msra.mxu0 %v70
    %172 = vmatmul.bf16.gmra.mxu0 %v162
    %v173 = vpop.f32.mrf.mxu0
    %v174 = vadd.f32 0.0, %v173
    %v175 = vpop.f32.mrf.mxu0
    %176 = vdwg.mxu0
    %v177 = vadd.f32 %v158, %v174
    %v178 = vmul.f32 %v120, %v120
    %v179 = vmul.f32 %v178, 0.25
    %v180 = vsub.f32 %v177, %v179
    %v181 = vmul.f32 %v180, 0.33333334
    %v182 = vmax.f32 %v181, 1e-06
    %v183 = vmin.f32 %v182, 1000000.0
    %v184 = vlog2.pop %v183
    %v185 = vmul.f32 %v184, 0.6931472
    %vm186 = vcmask 56320
    %187 = vst.msk [vmem:[#allocation7] sm:$0xff] %vm186, %v185
    // Predicated region
    $region18: #{tpu_custom_call.1} parent=1 // pred_check
      _
    $region19: #{tpu_custom_call.1} parent=1 // pred_check_branch
      %189 = sbr.rel (0) target = $region21
    $region20: #{tpu_custom_call.1} parent=1 // pred_region
      %191 = vsyncadd [#allocation4], 0
      %s193 = sshll.u32 [#allocation7], 4
      %s194 = int_to_ptr.vmem [resolvable:$true] %s193
      %s195 = sshll.u32 %s2, 4
      %s196 = int_to_ptr.hbm [resolvable:$true] %s195
      %198 = dma.vmem_to_hbm [thread:$0]  %s194, 128, %s196, [#allocation4]
    $region21: #{tpu_custom_call.1} parent=1 // pred_fallthru
      _
    // Predicated region
    $region22: #{tpu_custom_call.1} parent=1 // pred_check
      _
    $region23: #{tpu_custom_call.1} parent=1 // pred_check_branch
      %200 = sbr.rel (0) target = $region25
    $region24: #{tpu_custom_call.1} parent=1 // pred_region
      %202 = dma.done [#allocation4], 128
    $region25: #{tpu_custom_call.1} parent=1 // pred_fallthru
      _
    %203 = vsyncpa [#allocation3], 1
    %204 = vsyncpa [#allocation6], 1
    %205 = vsyncpa [#allocation4], 1

</llo_original>
